<compile_context>
chip_gen: v7x
topology: tpu7x:2x2x1
jax: 0.10.0
libtpu: 0.0.40
codegen_flags: <defaults>
</compile_context>

<pallas_src>
import functools

import jax
import jax.numpy as jnp
from jax.experimental import pallas as pl
from jax.experimental.pallas import tpu as pltpu

EPS = 1e-5
HIDDEN = 32  # hidden width of f_fc / g_fc: Linear(2,32) -> ReLU -> Linear(32,1)


def _selfnorm_kernel(x_ref, w_ref, o_ref, *, hw_valid, eps):
    # x_ref: (Bt, C, HWp)  (HWp is HW padded up to a multiple of 128)
    # w_ref: (10, HIDDEN) packed weights:
    #   rows 0-1: w1f (2,H), row 2: b1f, row 3: w2f, row 4[:1]: b2f
    #   rows 5-6: w1g (2,H), row 7: b1g, row 8: w2g, row 9[:1]: b2g
    x = x_ref[...]                                   # [Bt, C, HWp] f32
    hwp = x.shape[-1]

    # ---- per-(b, c) spatial statistics (mask out padded lanes) ----
    if hwp == hw_valid:
        x_sum_src = x
        mask = None
    else:
        lane = jax.lax.broadcasted_iota(jnp.int32, (1, 1, hwp), 2)
        mask = (lane < hw_valid).astype(x.dtype)     # [1, 1, HWp]
        x_sum_src = x * mask

    inv_n = 1.0 / float(hw_valid)
    mean = jnp.sum(x_sum_src, axis=-1, keepdims=True) * inv_n        # [Bt, C, 1]

    diff = x - mean                                                  # consumed by reduction only
    if mask is not None:
        diff = diff * mask
    # unbiased variance (torch.var default). NOTE: H*W == 1 yields NaN, same as PyTorch.
    var = jnp.sum(diff * diff, axis=-1, keepdims=True) * (1.0 / (float(hw_valid) - 1.0))

    std = jnp.sqrt(var + eps)                                        # [Bt, C, 1]  (per-channel, tiny)
    inv_std = 1.0 / std                                              # per-channel reciprocal (tiny)

    # ---- tiny MLPs on the VPU (do NOT use the MXU for a [C,2]@[2,32]) ----
    w = w_ref[...]                                                   # [10, HIDDEN]

    def mlp(base):
        w1 = w[base + 0:base + 2, :]                                 # [2, H]
        b1 = w[base + 2:base + 3, :]                                 # [1, H]
        w2 = w[base + 3:base + 4, :]                                 # [1, H]
        b2 = w[base + 4:base + 5, 0:1]                               # [1, 1]
        # h[b, c, :] = mean[b,c]*W1[0,:] + std[b,c]*W1[1,:] + b1
        h = mean * w1[0:1, :] + std * w1[1:2, :] + b1                # [Bt, C, H]
        h = jnp.maximum(h, 0.0)
        return jnp.sum(h * w2, axis=-1, keepdims=True) + b2          # [Bt, C, 1]

    logit_f = mlp(0)
    logit_g = mlp(5)

    def softmax_over_c(logit):                                       # softmax along channel axis
        m = jnp.max(logit, axis=1, keepdims=True)
        e = jnp.exp(logit - m)
        return e / jnp.sum(e, axis=1, keepdims=True)                 # [Bt, C, 1]

    f_w = softmax_over_c(logit_f)
    g_w = softmax_over_c(logit_g)

    mean_weighted = jnp.sum(f_w * mean, axis=1, keepdims=True)       # [Bt, 1, 1]
    std_weighted = jnp.sum(g_w * std, axis=1, keepdims=True)         # [Bt, 1, 1]

    # ---- fold normalization + affine into one per-channel scale/shift ----
    scale = inv_std * std_weighted                                   # [Bt, C, 1]
    shift = mean_weighted - mean * scale                             # [Bt, C, 1]

    o_ref[...] = (x * scale + shift).astype(o_ref.dtype)             # 2 VALU ops / element


def _pack_params(params):
    """Pack the 8 tiny tensors into one (10, HIDDEN) slab (one DMA, one BlockSpec)."""
    hid = params["w1f"].shape[1]

    def half(suffix):
        b2_row = jnp.zeros((1, hid), jnp.float32).at[0, 0].set(params[f"b2{suffix}"][0, 0])
        return jnp.concatenate(
            [params[f"w1{suffix}"], params[f"b1{suffix}"], params[f"w2{suffix}"], b2_row],
            axis=0)                                                  # (5, hid)

    return jnp.concatenate([half("f"), half("g")], axis=0)           # (10, hid)


def selfnorm_pallas(x, params, *, target_block_bytes=4 << 20):
    """x: [B, C, H, W] float32. params: dict of MLP weights. Returns [B, C, H, W]."""
    B, C, H, W = x.shape
    HW = H * W
    HWp = ((HW + 127) // 128) * 128                                  # lane-dense trailing dim

    x2 = x.reshape(B, C, HW)
    if HWp != HW:
        x2 = jnp.pad(x2, ((0, 0), (0, 0), (0, HWp - HW)))

    # Choose how many batch elements to pack per block: largest divisor of B whose
    # block stays under ~target_block_bytes (bigger tiles => closer to HBM roofline).
    per_b_bytes = C * HWp * x2.dtype.itemsize
    bt = 1
    for d in range(1, B + 1):
        if B % d == 0 and d * per_b_bytes <= target_block_bytes:
            bt = d

    wpack = _pack_params(params)

    kernel = functools.partial(_selfnorm_kernel, hw_valid=HW, eps=EPS)

    cost = pl.CostEstimate(
        flops=int(8 * B * C * HW),
        transcendentals=int(4 * B * C),
        bytes_accessed=int(2 * B * C * HWp * x2.dtype.itemsize),
    )

    out2 = pl.pallas_call(
        kernel,
        out_shape=jax.ShapeDtypeStruct((B, C, HWp), x.dtype),
        grid_spec=pltpu.PrefetchScalarGridSpec(
            num_scalar_prefetch=0,
            grid=(B // bt,),
            in_specs=[
                pl.BlockSpec((bt, C, HWp), lambda b: (b, 0, 0)),
                pl.BlockSpec(wpack.shape, lambda b: (0, 0)),
            ],
            out_specs=pl.BlockSpec((bt, C, HWp), lambda b: (b, 0, 0)),
        ),
        compiler_params=pltpu.CompilerParams(
            dimension_semantics=("parallel",),
            vmem_limit_bytes=64 * 1024 * 1024,
        ),
        cost_estimate=cost,
    )(x2, wpack)

    # TODO(synk): for very large C*H*W (block > ~8 MB) switch to a two-pass
    # stats/apply structure with HW-tiled parallel grid axes (v7x VMEM / 2-TC).
    if HWp != HW:
        out2 = out2[:, :, :HW]
    return out2.reshape(B, C, H, W)


def init_params(key):
    """Deterministic init mimicking nn.Linear's uniform(-1/sqrt(fan_in), 1/sqrt(fan_in)).

    Weight layouts (already transposed for right-multiplication in the kernel):
      w1*: [2, HIDDEN]   (Linear(2,32).weight.T)
      b1*: [1, HIDDEN]
      w2*: [1, HIDDEN]   (Linear(32,1).weight)
      b2*: [1, 1]
    """
    keys = jax.random.split(key, 8)
    b1 = 1.0 / jnp.sqrt(2.0)
    b2 = 1.0 / jnp.sqrt(float(HIDDEN))
    u = lambda k, shape, bound: jax.random.uniform(k, shape, jnp.float32, -bound, bound)
    return {
        "w1f": u(keys[0], (2, HIDDEN), b1), "b1f": u(keys[1], (1, HIDDEN), b1),
        "w2f": u(keys[2], (1, HIDDEN), b2), "b2f": u(keys[3], (1, 1), b2),
        "w1g": u(keys[4], (2, HIDDEN), b1), "b1g": u(keys[5], (1, HIDDEN), b1),
        "w2g": u(keys[6], (1, HIDDEN), b2), "b2g": u(keys[7], (1, 1), b2),
    }


def selfnorm_reference(x, params):
    """Pure-JAX reference mirroring the PyTorch forward (for verification)."""
    B, C, H, W = x.shape
    xr = x.reshape(B, C, H * W)
    mean = xr.mean(axis=-1)                                           # [B, C]
    var = xr.var(axis=-1, ddof=1)                                     # unbiased
    std = jnp.sqrt(var + EPS)                                         # [B, C]
    ms = jnp.stack([mean, std], axis=2)                               # [B, C, 2]

    def mlp(ms, w1, b1, w2, b2):
        h = jnp.maximum(ms @ w1 + b1, 0.0)                            # [B, C, 32]
        return (h * w2).sum(-1) + b2[0, 0]                            # [B, C]

    f_w = jax.nn.softmax(mlp(ms, params["w1f"], params["b1f"], params["w2f"], params["b2f"]), axis=1)
    g_w = jax.nn.softmax(mlp(ms, params["w1g"], params["b1g"], params["w2g"], params["b2g"]), axis=1)
    mean_w = jnp.sum(f_w * mean, axis=1)[:, None, None, None]
    std_w = jnp.sum(g_w * std, axis=1)[:, None, None, None]
    x_norm = (x - mean[:, :, None, None]) / std[:, :, None, None]
    return x_norm * std_w + mean_w


if __name__ == "__main__":
    key = jax.random.PRNGKey(0)
    kx, kp = jax.random.split(key)

    B, C, H, W = 2, 4, 16, 16
    x = jax.random.normal(kx, (B, C, H, W), dtype=jnp.float32) * 2.0 + 0.5
    params = init_params(kp)

    out = selfnorm_pallas(x, params)
    out = jax.block_until_ready(out)

    ref = selfnorm_reference(x, params)
    assert out.shape == (B, C, H, W)
    assert jnp.allclose(out, ref, atol=1e-4, rtol=1e-4), "mismatch vs reference"

    print("KERNEL_OK")
</pallas_src>

<mosaic_0001>
module attributes {stable_mosaic.version = 11 : i64} {
  func.func @_selfnorm_kernel(%arg0: i32, %arg1: memref<2x4x256xf32, #tpu.memory_space<vmem>>, %arg2: memref<10x32xf32, #tpu.memory_space<vmem>>, %arg3: memref<2x4x256xf32, #tpu.memory_space<vmem>>) attributes {dimension_semantics = [#tpu.dimension_semantics<parallel>], iteration_bounds = array<i64: 1>, scalar_prefetch = 0 : i64, scratch_operands = 0 : i64, tpu.core_type = #tpu.core_type<tc>, window_params = [{transform_indices = @transform_0, window_bounds = array<i64: 2, 4, 256>}, {pipeline_mode = #tpu.pipeline_mode<synchronous>, transform_indices = @transform_1, window_bounds = array<i64: 10, 32>}, {transform_indices = @transform_2, window_bounds = array<i64: 2, 4, 256>}]} {
    %c0 = arith.constant 0 : index
    %c0_0 = arith.constant 0 : index
    %c0_1 = arith.constant 0 : index
    %0 = vector.load %arg1[%c0, %c0_0, %c0_1] : memref<2x4x256xf32, #tpu.memory_space<vmem>>, vector<2x4x256xf32>
    %cst = arith.constant dense<0.000000e+00> : vector<2x4xf32>
    %1 = vector.multi_reduction <add>, %0, %cst [2] : vector<2x4x256xf32> to vector<2x4xf32>
    %2 = vector.shape_cast %1 : vector<2x4xf32> to vector<2x4x1xf32>
    %cst_2 = arith.constant 3.906250e-03 : f32
    %3 = vector.broadcast %cst_2 : f32 to vector<2x4x1xf32>
    %4 = arith.mulf %2, %3 : vector<2x4x1xf32>
    %5 = vector.broadcast %4 : vector<2x4x1xf32> to vector<2x4x256xf32>
    %6 = arith.subf %0, %5 : vector<2x4x256xf32>
    %7 = arith.mulf %6, %6 : vector<2x4x256xf32>
    %cst_3 = arith.constant dense<0.000000e+00> : vector<2x4xf32>
    %8 = vector.multi_reduction <add>, %7, %cst_3 [2] : vector<2x4x256xf32> to vector<2x4xf32>
    %9 = vector.shape_cast %8 : vector<2x4xf32> to vector<2x4x1xf32>
    %cst_4 = arith.constant 0.00392156886 : f32
    %10 = vector.broadcast %cst_4 : f32 to vector<2x4x1xf32>
    %11 = arith.mulf %9, %10 : vector<2x4x1xf32>
    %cst_5 = arith.constant 9.99999974E-6 : f32
    %12 = vector.broadcast %cst_5 : f32 to vector<2x4x1xf32>
    %13 = arith.addf %11, %12 : vector<2x4x1xf32>
    %14 = math.sqrt %13 : vector<2x4x1xf32>
    %cst_6 = arith.constant 1.000000e+00 : f32
    %15 = vector.broadcast %cst_6 : f32 to vector<2x4x1xf32>
    %16 = arith.divf %15, %14 : vector<2x4x1xf32>
    %c0_7 = arith.constant 0 : index
    %c0_8 = arith.constant 0 : index
    %17 = vector.load %arg2[%c0_7, %c0_8] : memref<10x32xf32, #tpu.memory_space<vmem>>, vector<10x32xf32>
    %18 = vector.extract_strided_slice %17 {offsets = [0, 0], sizes = [2, 32], strides = [1, 1]} : vector<10x32xf32> to vector<2x32xf32>
    %19 = vector.extract_strided_slice %17 {offsets = [2, 0], sizes = [1, 32], strides = [1, 1]} : vector<10x32xf32> to vector<1x32xf32>
    %20 = vector.extract_strided_slice %17 {offsets = [3, 0], sizes = [1, 32], strides = [1, 1]} : vector<10x32xf32> to vector<1x32xf32>
    %21 = vector.extract_strided_slice %17 {offsets = [4, 0], sizes = [1, 1], strides = [1, 1]} : vector<10x32xf32> to vector<1x1xf32>
    %22 = vector.extract_strided_slice %18 {offsets = [0, 0], sizes = [1, 32], strides = [1, 1]} : vector<2x32xf32> to vector<1x32xf32>
    %23 = vector.shape_cast %22 : vector<1x32xf32> to vector<1x1x32xf32>
    %24 = vector.broadcast %4 : vector<2x4x1xf32> to vector<2x4x32xf32>
    %25 = vector.broadcast %23 : vector<1x1x32xf32> to vector<2x4x32xf32>
    %26 = arith.mulf %24, %25 : vector<2x4x32xf32>
    %27 = vector.extract_strided_slice %18 {offsets = [1, 0], sizes = [1, 32], strides = [1, 1]} : vector<2x32xf32> to vector<1x32xf32>
    %28 = vector.shape_cast %27 : vector<1x32xf32> to vector<1x1x32xf32>
    %29 = vector.broadcast %14 : vector<2x4x1xf32> to vector<2x4x32xf32>
    %30 = vector.broadcast %28 : vector<1x1x32xf32> to vector<2x4x32xf32>
    %31 = arith.mulf %29, %30 : vector<2x4x32xf32>
    %32 = arith.addf %26, %31 : vector<2x4x32xf32>
    %33 = vector.shape_cast %19 : vector<1x32xf32> to vector<1x1x32xf32>
    %34 = vector.broadcast %33 : vector<1x1x32xf32> to vector<2x4x32xf32>
    %35 = arith.addf %32, %34 : vector<2x4x32xf32>
    %cst_9 = arith.constant 0.000000e+00 : f32
    %36 = vector.broadcast %cst_9 : f32 to vector<2x4x32xf32>
    %37 = arith.maximumf %35, %36 : vector<2x4x32xf32>
    %38 = vector.shape_cast %20 : vector<1x32xf32> to vector<1x1x32xf32>
    %39 = vector.broadcast %38 : vector<1x1x32xf32> to vector<2x4x32xf32>
    %40 = arith.mulf %37, %39 : vector<2x4x32xf32>
    %cst_10 = arith.constant dense<0.000000e+00> : vector<2x4xf32>
    %41 = vector.multi_reduction <add>, %40, %cst_10 [2] : vector<2x4x32xf32> to vector<2x4xf32>
    %42 = vector.shape_cast %41 : vector<2x4xf32> to vector<2x4x1xf32>
    %43 = vector.shape_cast %21 : vector<1x1xf32> to vector<1x1x1xf32>
    %44 = vector.broadcast %43 : vector<1x1x1xf32> to vector<2x4x1xf32>
    %45 = arith.addf %42, %44 : vector<2x4x1xf32>
    %46 = vector.extract_strided_slice %17 {offsets = [5, 0], sizes = [2, 32], strides = [1, 1]} : vector<10x32xf32> to vector<2x32xf32>
    %47 = vector.extract_strided_slice %17 {offsets = [7, 0], sizes = [1, 32], strides = [1, 1]} : vector<10x32xf32> to vector<1x32xf32>
    %48 = vector.extract_strided_slice %17 {offsets = [8, 0], sizes = [1, 32], strides = [1, 1]} : vector<10x32xf32> to vector<1x32xf32>
    %49 = vector.extract_strided_slice %17 {offsets = [9, 0], sizes = [1, 1], strides = [1, 1]} : vector<10x32xf32> to vector<1x1xf32>
    %50 = vector.extract_strided_slice %46 {offsets = [0, 0], sizes = [1, 32], strides = [1, 1]} : vector<2x32xf32> to vector<1x32xf32>
    %51 = vector.shape_cast %50 : vector<1x32xf32> to vector<1x1x32xf32>
    %52 = vector.broadcast %4 : vector<2x4x1xf32> to vector<2x4x32xf32>
    %53 = vector.broadcast %51 : vector<1x1x32xf32> to vector<2x4x32xf32>
    %54 = arith.mulf %52, %53 : vector<2x4x32xf32>
    %55 = vector.extract_strided_slice %46 {offsets = [1, 0], sizes = [1, 32], strides = [1, 1]} : vector<2x32xf32> to vector<1x32xf32>
    %56 = vector.shape_cast %55 : vector<1x32xf32> to vector<1x1x32xf32>
    %57 = vector.broadcast %14 : vector<2x4x1xf32> to vector<2x4x32xf32>
    %58 = vector.broadcast %56 : vector<1x1x32xf32> to vector<2x4x32xf32>
    %59 = arith.mulf %57, %58 : vector<2x4x32xf32>
    %60 = arith.addf %54, %59 : vector<2x4x32xf32>
    %61 = vector.shape_cast %47 : vector<1x32xf32> to vector<1x1x32xf32>
    %62 = vector.broadcast %61 : vector<1x1x32xf32> to vector<2x4x32xf32>
    %63 = arith.addf %60, %62 : vector<2x4x32xf32>
    %cst_11 = arith.constant 0.000000e+00 : f32
    %64 = vector.broadcast %cst_11 : f32 to vector<2x4x32xf32>
    %65 = arith.maximumf %63, %64 : vector<2x4x32xf32>
    %66 = vector.shape_cast %48 : vector<1x32xf32> to vector<1x1x32xf32>
    %67 = vector.broadcast %66 : vector<1x1x32xf32> to vector<2x4x32xf32>
    %68 = arith.mulf %65, %67 : vector<2x4x32xf32>
    %cst_12 = arith.constant dense<0.000000e+00> : vector<2x4xf32>
    %69 = vector.multi_reduction <add>, %68, %cst_12 [2] : vector<2x4x32xf32> to vector<2x4xf32>
    %70 = vector.shape_cast %69 : vector<2x4xf32> to vector<2x4x1xf32>
    %71 = vector.shape_cast %49 : vector<1x1xf32> to vector<1x1x1xf32>
    %72 = vector.broadcast %71 : vector<1x1x1xf32> to vector<2x4x1xf32>
    %73 = arith.addf %70, %72 : vector<2x4x1xf32>
    %cst_13 = arith.constant dense<0xFF800000> : vector<2x1xf32>
    %74 = vector.multi_reduction <maximumf>, %45, %cst_13 [1] : vector<2x4x1xf32> to vector<2x1xf32>
    %75 = vector.shape_cast %74 : vector<2x1xf32> to vector<2x1x1xf32>
    %76 = vector.broadcast %75 : vector<2x1x1xf32> to vector<2x4x1xf32>
    %77 = arith.subf %45, %76 : vector<2x4x1xf32>
    %78 = math.exp %77 : vector<2x4x1xf32>
    %cst_14 = arith.constant dense<0.000000e+00> : vector<2x1xf32>
    %79 = vector.multi_reduction <add>, %78, %cst_14 [1] : vector<2x4x1xf32> to vector<2x1xf32>
    %80 = vector.shape_cast %79 : vector<2x1xf32> to vector<2x1x1xf32>
    %81 = vector.broadcast %80 : vector<2x1x1xf32> to vector<2x4x1xf32>
    %82 = arith.divf %78, %81 : vector<2x4x1xf32>
    %cst_15 = arith.constant dense<0xFF800000> : vector<2x1xf32>
    %83 = vector.multi_reduction <maximumf>, %73, %cst_15 [1] : vector<2x4x1xf32> to vector<2x1xf32>
    %84 = vector.shape_cast %83 : vector<2x1xf32> to vector<2x1x1xf32>
    %85 = vector.broadcast %84 : vector<2x1x1xf32> to vector<2x4x1xf32>
    %86 = arith.subf %73, %85 : vector<2x4x1xf32>
    %87 = math.exp %86 : vector<2x4x1xf32>
    %cst_16 = arith.constant dense<0.000000e+00> : vector<2x1xf32>
    %88 = vector.multi_reduction <add>, %87, %cst_16 [1] : vector<2x4x1xf32> to vector<2x1xf32>
    %89 = vector.shape_cast %88 : vector<2x1xf32> to vector<2x1x1xf32>
    %90 = vector.broadcast %89 : vector<2x1x1xf32> to vector<2x4x1xf32>
    %91 = arith.divf %87, %90 : vector<2x4x1xf32>
    %92 = arith.mulf %82, %4 : vector<2x4x1xf32>
    %cst_17 = arith.constant dense<0.000000e+00> : vector<2x1xf32>
    %93 = vector.multi_reduction <add>, %92, %cst_17 [1] : vector<2x4x1xf32> to vector<2x1xf32>
    %94 = vector.shape_cast %93 : vector<2x1xf32> to vector<2x1x1xf32>
    %95 = arith.mulf %91, %14 : vector<2x4x1xf32>
    %cst_18 = arith.constant dense<0.000000e+00> : vector<2x1xf32>
    %96 = vector.multi_reduction <add>, %95, %cst_18 [1] : vector<2x4x1xf32> to vector<2x1xf32>
    %97 = vector.shape_cast %96 : vector<2x1xf32> to vector<2x1x1xf32>
    %98 = vector.broadcast %97 : vector<2x1x1xf32> to vector<2x4x1xf32>
    %99 = arith.mulf %16, %98 : vector<2x4x1xf32>
    %100 = arith.mulf %4, %99 : vector<2x4x1xf32>
    %101 = vector.broadcast %94 : vector<2x1x1xf32> to vector<2x4x1xf32>
    %102 = arith.subf %101, %100 : vector<2x4x1xf32>
    %103 = vector.broadcast %99 : vector<2x4x1xf32> to vector<2x4x256xf32>
    %104 = arith.mulf %0, %103 : vector<2x4x256xf32>
    %105 = vector.broadcast %102 : vector<2x4x1xf32> to vector<2x4x256xf32>
    %106 = arith.addf %104, %105 : vector<2x4x256xf32>
    %c0_19 = arith.constant 0 : index
    %c0_20 = arith.constant 0 : index
    %c0_21 = arith.constant 0 : index
    %107 = vector.load %arg3[%c0_19, %c0_20, %c0_21] : memref<2x4x256xf32, #tpu.memory_space<vmem>>, vector<2x4x256xf32>
    tpu.vector_store %arg3[%c0_19, %c0_20, %c0_21], %106 {strides = array<i32>} : memref<2x4x256xf32, #tpu.memory_space<vmem>>, vector<2x4x256xf32>,
    return
  }
  func.func @transform_0(%arg0: i32) -> (i32, i32, i32) {
    %c0_i32 = arith.constant 0 : i32
    %c0_i32_0 = arith.constant 0 : i32
    %c0_i32_1 = arith.constant 0 : i32
    return %arg0, %c0_i32, %c0_i32_0 : i32, i32, i32
  }
  func.func @transform_1(%arg0: i32) -> (i32, i32) {
    %c0_i32 = arith.constant 0 : i32
    %c0_i32_0 = arith.constant 0 : i32
    %c0_i32_1 = arith.constant 0 : i32
    return %c0_i32, %c0_i32_0 : i32, i32
  }
  func.func @transform_2(%arg0: i32) -> (i32, i32, i32) {
    %c0_i32 = arith.constant 0 : i32
    %c0_i32_0 = arith.constant 0 : i32
    %c0_i32_1 = arith.constant 0 : i32
    return %arg0, %c0_i32, %c0_i32_0 : i32, i32, i32
  }
}

</mosaic_0001>

<llo_original>
// kernel: tpu_custom_call.1
$region0: #{tpu_custom_call.1}
  #allocation0 [shape = 'u32[]', space=smem, size = 0x4, offset = 0x4, fixed_abs, tag = 'smem constant byte address 0x4 - core index']
  #allocation1 [shape = 'u32[144,128]{1,0:T(1,128)}', space=vmem, size = 0x12000, scoped, tag = 'internal scratch']
  %s0 = inlined_call_operand.hbm [shape: f32[2,4,256], index: 0, kind: input, shape index: {}]
  %s1 = inlined_call_operand.hbm [shape: f32[10,32], index: 1, kind: input, shape index: {}]
  %s2 = inlined_call_operand.hbm [shape: f32[2,4,256], index: 2, kind: output, shape index: {}]
  %s3 = sld [smem:[#allocation0]]
  $region26: #{tpu_custom_call.1} parent=0
    _
  %s5 = ssub.s32 1, %s3
  %s6 = scalar_select 0, %s5, %s3
  $region1: #{tpu_custom_call.1} parent=0
    #allocation2 [shape = 'u8[8192]{0}', space=vmem, size = 0x2000, scoped, tag = 'input window, operand 0, single buffered']
    #allocation3 [shape = 's32[1]{0}', space=sflag, size = 0x4, scoped, tag = 'scoped memory for tpu_custom_call.1']
    #allocation4 [shape = 's32[1]{0}', space=sflag, size = 0x4, scoped, tag = 'scoped memory for tpu_custom_call.1']
    #allocation5 [shape = 'u8[8192]{0}', space=vmem, size = 0x2000, scoped, tag = 'input window, operand 1, single buffered']
    #allocation6 [shape = 's32[1]{0}', space=sflag, size = 0x4, scoped, tag = 'scoped memory for tpu_custom_call.1']
    #allocation7 [shape = 'u8[8192]{0}', space=vmem, size = 0x2000, scoped, tag = 'output window, operand 0, single buffered']
    %7 = vsyncpa [#allocation3], 0
    %8 = vsyncpa [#allocation6], 0
    %9 = vsyncpa [#allocation4], 0
    // Predicated region
    $region2: #{tpu_custom_call.1} parent=1 // pred_check
      _
    $region3: #{tpu_custom_call.1} parent=1 // pred_check_branch
      %11 = sbr.rel (0) target = $region5
    $region4: #{tpu_custom_call.1} parent=1 // pred_region
      %s13 = ssub.s32 256, 256
      %14 = vsyncadd [#allocation3], %s13
      %s15 = sshll.u32 [#allocation2], 4
      %s16 = int_to_ptr.vmem [resolvable:$true] %s15
      %21 = dma.hbm_to_vmem [thread:$0]  %s0, 256, %s16, [#allocation3], 128, 128, 8
    $region5: #{tpu_custom_call.1} parent=1 // pred_fallthru
      _
    // Predicated region
    $region6: #{tpu_custom_call.1} parent=1 // pred_check
      _
    $region7: #{tpu_custom_call.1} parent=1 // pred_check_branch
      %23 = sbr.rel (0) target = $region9
    $region8: #{tpu_custom_call.1} parent=1 // pred_region
      %s25 = ssub.s32 256, 256
      %26 = vsyncadd [#allocation6], %s25
      %s27 = sshll.u32 [#allocation5], 4
      %s28 = int_to_ptr.vmem [resolvable:$true] %s27
      %33 = dma.hbm_to_vmem [thread:$0]  %s1, 256, %s28, [#allocation6], 128, 128, 8
    $region9: #{tpu_custom_call.1} parent=1 // pred_fallthru
      _
    // Predicated region
    $region10: #{tpu_custom_call.1} parent=1 // pred_check
      _
    $region11: #{tpu_custom_call.1} parent=1 // pred_check_branch
      %35 = sbr.rel (0) target = $region13
    $region12: #{tpu_custom_call.1} parent=1 // pred_region
      %36 = dma.done [#allocation3], 256
    $region13: #{tpu_custom_call.1} parent=1 // pred_fallthru
      _
    // Predicated region
    $region14: #{tpu_custom_call.1} parent=1 // pred_check
      _
    $region15: #{tpu_custom_call.1} parent=1 // pred_check_branch
      %38 = sbr.rel (0) target = $region17
    $region16: #{tpu_custom_call.1} parent=1 // pred_region
      %39 = dma.done [#allocation6], 256
    $region17: #{tpu_custom_call.1} parent=1 // pred_fallthru
      _
    %v40 = vld [vmem:[#allocation2] sm:$0xff]
    %v41 = vld [vmem:[#allocation2 + $0x8] sm:$0xff]
    %v44 = vcombine.high %v40, %v40
    %v45 = vcombine.high %v41, %v41
    %vm48 = vcmask 1043456
    %v49 = vsel %vm48, %v40, 0.0
    %v50 = vsel %vm48, %v44, 0.0
    %v51 = vadd.f32 %v49, %v50
    %52 = vadd.xlane.f32.xlu0 %v51
    %v53 = vpop.xlane.xlu0 %52
    %v54 = vsel %vm48, %v41, 0.0
    %v55 = vsel %vm48, %v45, 0.0
    %v56 = vadd.f32 %v54, %v55
    %57 = vadd.xlane.f32.xlu0 %v56
    %v58 = vpop.xlane.xlu0 %57
    %v59 = vmul.f32 %v53, 0.00390625
    %v60 = vmul.f32 %v58, 0.00390625
    %v64 = vunpack.c.l.s4 839922192
    %v65 = vunpack.c.0.s8 %v64
    %v66 = vlaneseq
    %v67 = vshrl.u32 %v66, 7
    %v68 = vsub.s32 %v65, %v67
    %v69 = vrot.slane %v59, %v68
    %v71 = vunpack.c.l.s4 839922192
    %v72 = vunpack.c.0.s8 %v71
    %v73 = vlaneseq
    %v74 = vshrl.u32 %v73, 7
    %v75 = vsub.s32 %v72, %v74
    %v76 = vrot.slane %v60, %v75
    %v79 = vsub.f32 %v40, %v69
    %v80 = vsub.f32 %v41, %v76
    %v81 = vmul.f32 %v79, %v79
    %v82 = vmul.f32 %v80, %v80
    %v85 = vcombine.high %v81, %v81
    %v86 = vcombine.high %v82, %v82
    %v89 = vsel %vm48, %v81, 0.0
    %v90 = vsel %vm48, %v85, 0.0
    %v91 = vadd.f32 %v89, %v90
    %92 = vadd.xlane.f32.xlu0 %v91
    %v93 = vpop.xlane.xlu0 %92
    %v94 = vsel %vm48, %v82, 0.0
    %v95 = vsel %vm48, %v86, 0.0
    %v96 = vadd.f32 %v94, %v95
    %97 = vadd.xlane.f32.xlu0 %v96
    %v98 = vpop.xlane.xlu0 %97
    %v99 = vmul.f32 %v93, 0.003921569
    %v100 = vmul.f32 %v98, 0.003921569
    %v101 = vadd.f32 %v99, 1e-05
    %v102 = vadd.f32 %v100, 1e-05
    %v103 = vrsqrt.pop %v101
    %v104 = vmul.f32 %v101, %v103
    %vm105 = vcmp.eq.f32.partialorder %v101, inf
    %v106 = vsel %vm105, %v101, %v104
    %vm107 = vcmp.eq.f32.partialorder %v101, 0.0
    %v108 = vand.u32 %v101, 2147483648
    %v109 = vsel %vm107, %v108, %v106
    %v110 = vrsqrt.pop %v102
    %v111 = vmul.f32 %v102, %v110
    %vm112 = vcmp.eq.f32.partialorder %v102, inf
    %v113 = vsel %vm112, %v102, %v111
    %vm114 = vcmp.eq.f32.partialorder %v102, 0.0
    %v115 = vand.u32 %v102, 2147483648
    %v116 = vsel %vm114, %v115, %v113
    %v117 = vrcp.pop %v109
    %v118 = vmul.f32 1.0, %v117
    %v119 = vrcp.pop %v116
    %v120 = vmul.f32 1.0, %v119
    %v121 = vld [vmem:[#allocation5] sm:$0xff]
    %v122 = vld [vmem:[#allocation5 + $0x8] sm:$0x3]
    %v123 = vlaneseq
    %v124 = vshrl.u32 %v123, 7
    %v125 = vsub.s32 0, %v124
    %v126 = vrot.slane %v121, %v125
    %v127 = vmul.f32 %v59, %v126
    %v128 = vmul.f32 %v60, %v126
    %v129 = vlaneseq
    %v130 = vshrl.u32 %v129, 7
    %v131 = vsub.s32 1, %v130
    %v132 = vrot.slane %v121, %v131
    %v133 = vmul.f32 %v109, %v132
    %v134 = vmul.f32 %v116, %v132
    %v135 = vadd.f32 %v127, %v133
    %v136 = vadd.f32 %v128, %v134
    %v137 = vlaneseq
    %v138 = vshrl.u32 %v137, 7
    %v139 = vsub.s32 2, %v138
    %v140 = vrot.slane %v121, %v139
    %v141 = vadd.f32 %v135, %v140
    %v142 = vadd.f32 %v136, %v140
    %v143 = vmax.f32 %v141, 0.0
    %v144 = vmax.f32 %v142, 0.0
    %v145 = vlaneseq
    %v146 = vshrl.u32 %v145, 7
    %v147 = vsub.s32 3, %v146
    %v148 = vrot.slane %v121, %v147
    %v149 = vmul.f32 %v143, %v148
    %v150 = vmul.f32 %v144, %v148
    %vm151 = vcmask 257024
    %v152 = vsel %vm151, %v149, 0.0
    %153 = vadd.xlane.f32.xlu0 %v152
    %v154 = vpop.xlane.xlu0 %153
    %v155 = vsel %vm151, %v150, 0.0
    %156 = vadd.xlane.f32.xlu0 %v155
    %v157 = vpop.xlane.xlu0 %156
    %v158 = vlaneseq
    %v159 = vshrl.u32 %v158, 7
    %v160 = vsub.s32 4, %v159
    %v161 = vrot.slane %v121, %v160
    %v162 = vadd.f32 %v154, %v161
    %v163 = vadd.f32 %v157, %v161
    %v164 = vlaneseq
    %v165 = vshrl.u32 %v164, 7
    %v166 = vsub.s32 5, %v165
    %v167 = vrot.slane %v121, %v166
    %v168 = vmul.f32 %v59, %v167
    %v169 = vmul.f32 %v60, %v167
    %v170 = vlaneseq
    %v171 = vshrl.u32 %v170, 7
    %v172 = vsub.s32 6, %v171
    %v173 = vrot.slane %v121, %v172
    %v174 = vmul.f32 %v109, %v173
    %v175 = vmul.f32 %v116, %v173
    %v176 = vadd.f32 %v168, %v174
    %v177 = vadd.f32 %v169, %v175
    %v178 = vlaneseq
    %v179 = vshrl.u32 %v178, 7
    %v180 = vsub.s32 7, %v179
    %v181 = vrot.slane %v121, %v180
    %v182 = vadd.f32 %v176, %v181
    %v183 = vadd.f32 %v177, %v181
    %v184 = vmax.f32 %v182, 0.0
    %v185 = vmax.f32 %v183, 0.0
    %v186 = vlaneseq
    %v187 = vshrl.u32 %v186, 7
    %v188 = vsub.s32 0, %v187
    %v189 = vrot.slane %v122, %v188
    %v190 = vmul.f32 %v184, %v189
    %v191 = vmul.f32 %v185, %v189
    %v192 = vsel %vm151, %v190, 0.0
    %193 = vadd.xlane.f32.xlu0 %v192
    %v194 = vpop.xlane.xlu0 %193
    %v195 = vsel %vm151, %v191, 0.0
    %196 = vadd.xlane.f32.xlu0 %v195
    %v197 = vpop.xlane.xlu0 %196
    %v198 = vlaneseq
    %v199 = vshrl.u32 %v198, 7
    %v200 = vsub.s32 1, %v199
    %v201 = vrot.slane %v122, %v200
    %v202 = vadd.f32 %v194, %v201
    %v203 = vadd.f32 %v197, %v201
    %vm204 = vcmask 3072
    %v205 = vsel %vm204, %v162, -inf
    %v206 = vrot.slane %v205, 4
    %v207 = vmax.f32 %v205, %v206
    %v208 = vrot.slane %v207, 2
    %v209 = vmax.f32 %v207, %v208
    %v210 = vrot.slane %v209, 1
    %v211 = vmax.f32 %v209, %v210
    %v212 = vsel %vm204, %v163, -inf
    %v213 = vrot.slane %v212, 4
    %v214 = vmax.f32 %v212, %v213
    %v215 = vrot.slane %v214, 2
    %v216 = vmax.f32 %v214, %v215
    %v217 = vrot.slane %v216, 1
    %v218 = vmax.f32 %v216, %v217
    %v219 = vsub.f32 %v162, %v211
    %v220 = vsub.f32 %v163, %v218
    %v221 = vmul.f32 %v219, 1.442695
    %v222 = vpow.pop %v221
    %v223 = vmul.f32 %v220, 1.442695
    %v224 = vpow.pop %v223
    %v225 = vsel %vm204, %v222, 0.0
    %v226 = vrot.slane %v225, 4
    %v227 = vadd.f32 %v225, %v226
    %v228 = vrot.slane %v227, 2
    %v229 = vadd.f32 %v227, %v228
    %v230 = vrot.slane %v229, 1
    %v231 = vadd.f32 %v229, %v230
    %v232 = vsel %vm204, %v224, 0.0
    %v233 = vrot.slane %v232, 4
    %v234 = vadd.f32 %v232, %v233
    %v235 = vrot.slane %v234, 2
    %v236 = vadd.f32 %v234, %v235
    %v237 = vrot.slane %v236, 1
    %v238 = vadd.f32 %v236, %v237
    %v239 = vrcp.pop %v231
    %v240 = vmul.f32 %v222, %v239
    %v241 = vrcp.pop %v238
    %v242 = vmul.f32 %v224, %v241
    %v243 = vsel %vm204, %v202, -inf
    %v244 = vrot.slane %v243, 4
    %v245 = vmax.f32 %v243, %v244
    %v246 = vrot.slane %v245, 2
    %v247 = vmax.f32 %v245, %v246
    %v248 = vrot.slane %v247, 1
    %v249 = vmax.f32 %v247, %v248
    %v250 = vsel %vm204, %v203, -inf
    %v251 = vrot.slane %v250, 4
    %v252 = vmax.f32 %v250, %v251
    %v253 = vrot.slane %v252, 2
    %v254 = vmax.f32 %v252, %v253
    %v255 = vrot.slane %v254, 1
    %v256 = vmax.f32 %v254, %v255
    %v257 = vsub.f32 %v202, %v249
    %v258 = vsub.f32 %v203, %v256
    %v259 = vmul.f32 %v257, 1.442695
    %v260 = vpow.pop %v259
    %v261 = vmul.f32 %v258, 1.442695
    %v262 = vpow.pop %v261
    %v263 = vsel %vm204, %v260, 0.0
    %v264 = vrot.slane %v263, 4
    %v265 = vadd.f32 %v263, %v264
    %v266 = vrot.slane %v265, 2
    %v267 = vadd.f32 %v265, %v266
    %v268 = vrot.slane %v267, 1
    %v269 = vadd.f32 %v267, %v268
    %v270 = vsel %vm204, %v262, 0.0
    %v271 = vrot.slane %v270, 4
    %v272 = vadd.f32 %v270, %v271
    %v273 = vrot.slane %v272, 2
    %v274 = vadd.f32 %v272, %v273
    %v275 = vrot.slane %v274, 1
    %v276 = vadd.f32 %v274, %v275
    %v277 = vrcp.pop %v269
    %v278 = vmul.f32 %v260, %v277
    %v279 = vrcp.pop %v276
    %v280 = vmul.f32 %v262, %v279
    %v281 = vmul.f32 %v240, %v59
    %v282 = vmul.f32 %v242, %v60
    %v283 = vsel %vm204, %v281, 0.0
    %v284 = vrot.slane %v283, 4
    %v285 = vadd.f32 %v283, %v284
    %v286 = vrot.slane %v285, 2
    %v287 = vadd.f32 %v285, %v286
    %v288 = vrot.slane %v287, 1
    %v289 = vadd.f32 %v287, %v288
    %v290 = vsel %vm204, %v282, 0.0
    %v291 = vrot.slane %v290, 4
    %v292 = vadd.f32 %v290, %v291
    %v293 = vrot.slane %v292, 2
    %v294 = vadd.f32 %v292, %v293
    %v295 = vrot.slane %v294, 1
    %v296 = vadd.f32 %v294, %v295
    %v297 = vmul.f32 %v278, %v109
    %v298 = vmul.f32 %v280, %v116
    %v299 = vsel %vm204, %v297, 0.0
    %v300 = vrot.slane %v299, 4
    %v301 = vadd.f32 %v299, %v300
    %v302 = vrot.slane %v301, 2
    %v303 = vadd.f32 %v301, %v302
    %v304 = vrot.slane %v303, 1
    %v305 = vadd.f32 %v303, %v304
    %v306 = vsel %vm204, %v298, 0.0
    %v307 = vrot.slane %v306, 4
    %v308 = vadd.f32 %v306, %v307
    %v309 = vrot.slane %v308, 2
    %v310 = vadd.f32 %v308, %v309
    %v311 = vrot.slane %v310, 1
    %v312 = vadd.f32 %v310, %v311
    %v313 = vmul.f32 %v118, %v305
    %v314 = vmul.f32 %v120, %v312
    %v315 = vmul.f32 %v59, %v313
    %v316 = vmul.f32 %v60, %v314
    %v317 = vsub.f32 %v289, %v315
    %v318 = vsub.f32 %v296, %v316
    %320 = vset.pattern.permute.xlu0 0
    %321 = vperm.xlu0 %320, %v313
    %v322 = vpop.permute.xlu0 %321
    %324 = vset.pattern.permute.xlu0 0
    %325 = vperm.xlu0 %324, %v314
    %v326 = vpop.permute.xlu0 %325
    %v328 = vunpack.c.l.s4 839922192
    %v329 = vunpack.c.0.s8 %v328
    %v330 = vlaneseq
    %v331 = vshrl.u32 %v330, 7
    %v332 = vsub.s32 %v329, %v331
    %v333 = vrot.slane %v322, %v332
    %v335 = vunpack.c.l.s4 839922192
    %v336 = vunpack.c.0.s8 %v335
    %v337 = vlaneseq
    %v338 = vshrl.u32 %v337, 7
    %v339 = vsub.s32 %v336, %v338
    %v340 = vrot.slane %v326, %v339
    %v343 = vmul.f32 %v40, %v333
    %v344 = vmul.f32 %v41, %v340
    %346 = vset.pattern.permute.xlu0 0
    %347 = vperm.xlu0 %346, %v317
    %v348 = vpop.permute.xlu0 %347
    %350 = vset.pattern.permute.xlu0 0
    %351 = vperm.xlu0 %350, %v318
    %v352 = vpop.permute.xlu0 %351
    %v354 = vunpack.c.l.s4 839922192
    %v355 = vunpack.c.0.s8 %v354
    %v356 = vlaneseq
    %v357 = vshrl.u32 %v356, 7
    %v358 = vsub.s32 %v355, %v357
    %v359 = vrot.slane %v348, %v358
    %v361 = vunpack.c.l.s4 839922192
    %v362 = vunpack.c.0.s8 %v361
    %v363 = vlaneseq
    %v364 = vshrl.u32 %v363, 7
    %v365 = vsub.s32 %v362, %v364
    %v366 = vrot.slane %v352, %v365
    %v369 = vadd.f32 %v343, %v359
    %v370 = vadd.f32 %v344, %v366
    %371 = vst [vmem:[#allocation7] sm:$0xff] %v369
    %372 = vst [vmem:[#allocation7 + $0x8] sm:$0xff] %v370
    // Predicated region
    $region18: #{tpu_custom_call.1} parent=1 // pred_check
      _
    $region19: #{tpu_custom_call.1} parent=1 // pred_check_branch
      %374 = sbr.rel (0) target = $region21
    $region20: #{tpu_custom_call.1} parent=1 // pred_region
      %s376 = ssub.s32 256, 256
      %377 = vsyncadd [#allocation4], %s376
      %s378 = sshll.u32 [#allocation7], 4
      %s379 = int_to_ptr.vmem [resolvable:$true] %s378
      %384 = dma.vmem_to_hbm [thread:$0]  %s379, 256, %s2, [#allocation4], 128, 128, 8
    $region21: #{tpu_custom_call.1} parent=1 // pred_fallthru
      _
    // Predicated region
    $region22: #{tpu_custom_call.1} parent=1 // pred_check
      _
    $region23: #{tpu_custom_call.1} parent=1 // pred_check_branch
      %386 = sbr.rel (0) target = $region25
    $region24: #{tpu_custom_call.1} parent=1 // pred_region
      %387 = dma.done [#allocation4], 256
    $region25: #{tpu_custom_call.1} parent=1 // pred_fallthru
      _
    %388 = vsyncpa [#allocation3], 1
    %389 = vsyncpa [#allocation6], 1
    %390 = vsyncpa [#allocation4], 1

</llo_original>
